<compile_context>
chip_gen: v7x
topology: tpu7x:2x2x1
jax: 0.10.0
libtpu: 0.0.40
codegen_flags: <defaults>
</compile_context>

<pallas_src>
import jax
import jax.numpy as jnp
from jax import lax
from jax.experimental import pallas as pl
from jax.experimental.pallas import tpu as pltpu


def _round_up(x, m):
    return ((x + m - 1) // m) * m


def _tpu_vmem_and_multicore():
    """Best-effort query of per-core VMEM capacity and megacore-ness."""
    vmem = 64 << 20  # conservative fallback (v7x per-TC size)
    try:
        info = pltpu.get_tpu_info()
        vmem = int(getattr(info, "vmem_capacity_bytes", vmem))
    except Exception:
        pass
    kind = ""
    try:
        kind = jax.devices()[0].device_kind.lower()
    except Exception:
        pass
    multi_tc = ("v7" in kind) or ("7x" in kind)
    return vmem, multi_tc


def _choose_block_b(B, N, d_in, d_out_p, itemsize, multi_tc, vmem_budget):
    """Pick how many batch elements to fuse per grid step from a VMEM budget."""
    # Double-buffered x tile + out tile per batch element; weight/bias are
    # resident (single-buffered) for the whole grid.
    per_b = 2 * N * (d_in + d_out_p) * itemsize
    fixed = d_in * d_out_p * itemsize + d_out_p * itemsize
    slack = 2 << 20
    avail = max(vmem_budget - fixed - slack, per_b)
    bt = int(max(1, min(B, avail // per_b)))
    if multi_tc and B >= 2:
        # Keep >= 2 grid steps so dimension_semantics=("parallel",) can shard
        # the batch axis across the two TensorCores on v7x. On single-TC chips
        # (v5e/v6e) fewer, bigger steps win, so no clamp there.
        bt = min(bt, max(1, B // 2))
    # Prefer a divisor of B so no batch padding / output slicing is needed.
    best_div = 1
    for d in range(1, bt + 1):
        if B % d == 0:
            best_div = d
    if 2 * best_div >= bt:
        bt = best_div
    return bt


def _perm_equi1_sum_kernel(x_ref, w_ref, b_ref, o_ref):
    # x_ref: (Bt, N, Din)   w_ref: (Din, Dout_pad)   b_ref: (1, Dout_pad)
    bt, n, d_in = x_ref.shape
    d_out = o_ref.shape[-1]

    x = x_ref[...]                               # (Bt, N, Din)  f32
    xs = jnp.sum(x, axis=1, keepdims=True)       # SUM over the set axis
    xc = x - xs

    if n % 8 == 0:
        # Sublane-aligned: free leading-dim collapse -> one big MXU matmul.
        y = jnp.dot(xc.reshape(bt * n, d_in), w_ref[...],
                    preferred_element_type=jnp.float32)
        y = y + b_ref[...]                       # broadcast bias (1, Dout)
        o_ref[...] = y.reshape(bt, n, d_out).astype(o_ref.dtype)
    else:
        # Unaligned N: keep rank-3 so Mosaic does not materialize a relayout
        # copy for the collapse; still a single MXU contraction.
        y = lax.dot_general(
            xc, w_ref[...],
            dimension_numbers=(((2,), (0,)), ((), ())),
            preferred_element_type=jnp.float32)  # (Bt, N, Dout_pad)
        o_ref[...] = (y + b_ref[...]).astype(o_ref.dtype)


def perm_equi1_sum(x, weight, bias, *, block_b=None):
    """x: (B, N, D_in); weight: (D_out, D_in) [PyTorch layout]; bias: (D_out,)."""
    B, N, D_in = x.shape
    D_out = weight.shape[0]
    itemsize = jnp.dtype(x.dtype).itemsize

    # Only the OUTPUT feature dim is padded (lane-dense stores); x and the
    # contraction depth stay at the true D_in.
    d_out_p = _round_up(D_out, 128)

    vmem_cap, multi_tc = _tpu_vmem_and_multicore()
    if multi_tc or vmem_cap <= (64 << 20):
        vmem_budget = min(44 << 20, int(vmem_cap * 0.65))   # v7x-style cap
    else:
        vmem_budget = min(96 << 20, int(vmem_cap * 0.75))   # v5e/v6e

    if block_b is None:
        block_b = _choose_block_b(B, N, D_in, d_out_p, itemsize,
                                  multi_tc, vmem_budget)
    block_b = int(max(1, min(block_b, B)))
    grid_b = pl.cdiv(B, block_b)
    b_pad = grid_b * block_b

    # Batch padding only when block_b does not divide B (zero rows are exact:
    # they sum to zero and padded outputs are sliced off).
    xp = x
    if b_pad != B:
        xp = jnp.zeros((b_pad, N, D_in), x.dtype).at[:B].set(x)

    # Weight pre-transposed into the MXU's native (K, N) layout, out-dim padded.
    if d_out_p == D_out:
        wp = weight.T
        bp = bias.reshape(1, D_out)
    else:
        wp = jnp.zeros((D_in, d_out_p), weight.dtype).at[:, :D_out].set(weight.T)
        bp = jnp.zeros((1, d_out_p), bias.dtype).at[0, :D_out].set(bias)

    cost = pl.CostEstimate(
        flops=2 * B * N * D_in * D_out,
        transcendentals=0,
        bytes_accessed=(x.size + B * N * D_out + weight.size + bias.size)
        * itemsize,
    )

    # Per-step VMEM: double-buffered x/out tiles + resident weight/bias.
    usage = (2 * block_b * N * (D_in + d_out_p) * itemsize
             + D_in * d_out_p * itemsize + d_out_p * itemsize)
    vmem_limit = int(min(max(vmem_cap - (2 << 20), 32 << 20),
                         max(2 * usage + (4 << 20), 32 << 20)))

    out_shape = jax.ShapeDtypeStruct((b_pad, N, d_out_p), x.dtype)
    x_spec = pl.BlockSpec((block_b, N, D_in), lambda b: (b, 0, 0))
    out_spec = pl.BlockSpec((block_b, N, d_out_p), lambda b: (b, 0, 0))
    compiler_params = pltpu.CompilerParams(
        dimension_semantics=("parallel",),
        vmem_limit_bytes=vmem_limit,
    )

    def _call(single_buffer_consts):
        if single_buffer_consts:
            # Constant-index weight/bias: one VMEM buffer is enough.
            w_spec = pl.BlockSpec((D_in, d_out_p), lambda b: (0, 0),
                                  pipeline_mode=pl.Buffered(1))
            b_spec = pl.BlockSpec((1, d_out_p), lambda b: (0, 0),
                                  pipeline_mode=pl.Buffered(1))
        else:
            w_spec = pl.BlockSpec((D_in, d_out_p), lambda b: (0, 0))
            b_spec = pl.BlockSpec((1, d_out_p), lambda b: (0, 0))
        return pl.pallas_call(
            _perm_equi1_sum_kernel,
            out_shape=out_shape,
            grid=(grid_b,),
            in_specs=[x_spec, w_spec, b_spec],
            out_specs=out_spec,
            compiler_params=compiler_params,
            cost_estimate=cost,
        )(xp, wp, bp)

    try:
        out = _call(True)
    except Exception:
        # Some Pallas versions reject Buffered(1); the default double-buffering
        # is functionally identical (just wastes one weight-sized VMEM buffer).
        out = _call(False)

    if b_pad != B or d_out_p != D_out:
        out = out[:B, :, :D_out]
    return out


if __name__ == "__main__":
    key = jax.random.PRNGKey(0)

    def _check(B, N, D_in, D_out, k):
        kx, kw, kb = jax.random.split(k, 3)
        x = jax.random.normal(kx, (B, N, D_in), dtype=jnp.float32)
        # nn.Linear parameter shapes: weight (out_dim, in_dim), bias (out_dim,)
        weight = jax.random.normal(kw, (D_out, D_in), dtype=jnp.float32) * 0.1
        bias = jax.random.normal(kb, (D_out,), dtype=jnp.float32) * 0.1

        out = jax.block_until_ready(perm_equi1_sum(x, weight, bias))

        # Pure-JAX reference (same semantics as PermEqui1_sum.forward).
        xm = jnp.sum(x, axis=1, keepdims=True)
        ref = (x - xm) @ weight.T + bias
        assert out.shape == (B, N, D_out)
        assert jnp.allclose(out, ref, atol=1e-4, rtol=1e-4), (
            f"mismatch for B={B} N={N} Din={D_in} Dout={D_out}")

    k1, k2 = jax.random.split(key)
    # Small aligned shape (collapse -> single fused MXU matmul path).
    _check(2, 8, 32, 32, k1)
    # Awkward shape: N % 8 != 0, D_out not a multiple of 128, odd batch.
    _check(3, 7, 48, 20, k2)

    print("KERNEL_OK")
</pallas_src>

<mosaic_0001>
module attributes {stable_mosaic.version = 11 : i64} {
  func.func @_perm_equi1_sum_kernel(%arg0: i32, %arg1: memref<2x8x32xf32, #tpu.memory_space<vmem>>, %arg2: memref<32x128xf32, #tpu.memory_space<vmem>>, %arg3: memref<1x128xf32, #tpu.memory_space<vmem>>, %arg4: memref<2x8x128xf32, #tpu.memory_space<vmem>>) attributes {dimension_semantics = [#tpu.dimension_semantics<parallel>], iteration_bounds = array<i64: 1>, scalar_prefetch = 0 : i64, scratch_operands = 0 : i64, tpu.core_type = #tpu.core_type<tc>, window_params = [{transform_indices = @transform_0, window_bounds = array<i64: 2, 8, 32>}, {pipeline_mode = #tpu.pipeline_mode<synchronous>, transform_indices = @transform_1, window_bounds = array<i64: 32, 128>}, {pipeline_mode = #tpu.pipeline_mode<synchronous>, transform_indices = @transform_2, window_bounds = array<i64: 1, 128>}, {transform_indices = @transform_3, window_bounds = array<i64: 2, 8, 128>}]} {
    %c0 = arith.constant 0 : index
    %c0_0 = arith.constant 0 : index
    %c0_1 = arith.constant 0 : index
    %0 = vector.load %arg1[%c0, %c0_0, %c0_1] : memref<2x8x32xf32, #tpu.memory_space<vmem>>, vector<2x8x32xf32>
    %cst = arith.constant dense<0.000000e+00> : vector<2x32xf32>
    %1 = vector.multi_reduction <add>, %0, %cst [1] : vector<2x8x32xf32> to vector<2x32xf32>
    %2 = vector.shape_cast %1 : vector<2x32xf32> to vector<2x1x32xf32>
    %3 = vector.broadcast %2 : vector<2x1x32xf32> to vector<2x8x32xf32>
    %4 = arith.subf %0, %3 : vector<2x8x32xf32>
    %5 = vector.shape_cast %4 : vector<2x8x32xf32> to vector<16x32xf32>
    %c0_2 = arith.constant 0 : index
    %c0_3 = arith.constant 0 : index
    %6 = vector.load %arg2[%c0_2, %c0_3] : memref<32x128xf32, #tpu.memory_space<vmem>>, vector<32x128xf32>
    %cst_4 = arith.constant dense<0.000000e+00> : vector<16x128xf32>
    %7 = tpu.matmul %5, %6, %cst_4 {dimension_numbers = #tpu.dot_dimension_numbers<[1], [0], [0], [1], [0, 0, 1, 1], [], []>} : vector<16x32xf32>, vector<32x128xf32>, vector<16x128xf32> -> vector<16x128xf32>
    %c0_5 = arith.constant 0 : index
    %c0_6 = arith.constant 0 : index
    %8 = vector.load %arg3[%c0_5, %c0_6] : memref<1x128xf32, #tpu.memory_space<vmem>>, vector<1x128xf32>
    %9 = vector.broadcast %8 : vector<1x128xf32> to vector<16x128xf32>
    %10 = arith.addf %7, %9 : vector<16x128xf32>
    %11 = vector.shape_cast %10 : vector<16x128xf32> to vector<2x8x128xf32>
    %c0_7 = arith.constant 0 : index
    %c0_8 = arith.constant 0 : index
    %c0_9 = arith.constant 0 : index
    %12 = vector.load %arg4[%c0_7, %c0_8, %c0_9] : memref<2x8x128xf32, #tpu.memory_space<vmem>>, vector<2x8x128xf32>
    tpu.vector_store %arg4[%c0_7, %c0_8, %c0_9], %11 {strides = array<i32>} : memref<2x8x128xf32, #tpu.memory_space<vmem>>, vector<2x8x128xf32>,
    return
  }
  func.func @transform_0(%arg0: i32) -> (i32, i32, i32) {
    %c0_i32 = arith.constant 0 : i32
    %c0_i32_0 = arith.constant 0 : i32
    %c0_i32_1 = arith.constant 0 : i32
    return %arg0, %c0_i32, %c0_i32_0 : i32, i32, i32
  }
  func.func @transform_1(%arg0: i32) -> (i32, i32) {
    %c0_i32 = arith.constant 0 : i32
    %c0_i32_0 = arith.constant 0 : i32
    %c0_i32_1 = arith.constant 0 : i32
    return %c0_i32, %c0_i32_0 : i32, i32
  }
  func.func @transform_2(%arg0: i32) -> (i32, i32) {
    %c0_i32 = arith.constant 0 : i32
    %c0_i32_0 = arith.constant 0 : i32
    %c0_i32_1 = arith.constant 0 : i32
    return %c0_i32, %c0_i32_0 : i32, i32
  }
  func.func @transform_3(%arg0: i32) -> (i32, i32, i32) {
    %c0_i32 = arith.constant 0 : i32
    %c0_i32_0 = arith.constant 0 : i32
    %c0_i32_1 = arith.constant 0 : i32
    return %arg0, %c0_i32, %c0_i32_0 : i32, i32, i32
  }
}

module attributes {stable_mosaic.version = 11 : i64} {
  func.func @_perm_equi1_sum_kernel(%arg0: i32, %arg1: memref<2x8x32xf32, #tpu.memory_space<vmem>>, %arg2: memref<32x128xf32, #tpu.memory_space<vmem>>, %arg3: memref<1x128xf32, #tpu.memory_space<vmem>>, %arg4: memref<2x8x128xf32, #tpu.memory_space<vmem>>) attributes {dimension_semantics = [#tpu.dimension_semantics<parallel>], iteration_bounds = array<i64: 1>, scalar_prefetch = 0 : i64, scratch_operands = 0 : i64, tpu.core_type = #tpu.core_type<tc>, window_params = [{transform_indices = @transform_0, window_bounds = array<i64: 2, 8, 32>}, {pipeline_mode = #tpu.pipeline_mode<synchronous>, transform_indices = @transform_1, window_bounds = array<i64: 32, 128>}, {pipeline_mode = #tpu.pipeline_mode<synchronous>, transform_indices = @transform_2, window_bounds = array<i64: 1, 128>}, {transform_indices = @transform_3, window_bounds = array<i64: 2, 8, 128>}]} {
    %c0 = arith.constant 0 : index
    %c0_0 = arith.constant 0 : index
    %c0_1 = arith.constant 0 : index
    %0 = vector.load %arg1[%c0, %c0_0, %c0_1] : memref<2x8x32xf32, #tpu.memory_space<vmem>>, vector<2x8x32xf32>
    %cst = arith.constant dense<0.000000e+00> : vector<2x32xf32>
    %1 = vector.multi_reduction <add>, %0, %cst [1] : vector<2x8x32xf32> to vector<2x32xf32>
    %2 = vector.shape_cast %1 : vector<2x32xf32> to vector<2x1x32xf32>
    %3 = vector.broadcast %2 : vector<2x1x32xf32> to vector<2x8x32xf32>
    %4 = arith.subf %0, %3 : vector<2x8x32xf32>
    %5 = vector.shape_cast %4 : vector<2x8x32xf32> to vector<16x32xf32>
    %c0_2 = arith.constant 0 : index
    %c0_3 = arith.constant 0 : index
    %6 = vector.load %arg2[%c0_2, %c0_3] : memref<32x128xf32, #tpu.memory_space<vmem>>, vector<32x128xf32>
    %cst_4 = arith.constant dense<0.000000e+00> : vector<16x128xf32>
    %7 = tpu.matmul %5, %6, %cst_4 {dimension_numbers = #tpu.dot_dimension_numbers<[1], [0], [0], [1], [0, 0, 1, 1], [], []>} : vector<16x32xf32>, vector<32x128xf32>, vector<16x128xf32> -> vector<16x128xf32>
    %c0_5 = arith.constant 0 : index
    %c0_6 = arith.constant 0 : index
    %8 = vector.load %arg3[%c0_5, %c0_6] : memref<1x128xf32, #tpu.memory_space<vmem>>, vector<1x128xf32>
    %9 = vector.broadcast %8 : vector<1x128xf32> to vector<16x128xf32>
    %10 = arith.addf %7, %9 : vector<16x128xf32>
    %11 = vector.shape_cast %10 : vector<16x128xf32> to vector<2x8x128xf32>
    %c0_7 = arith.constant 0 : index
    %c0_8 = arith.constant 0 : index
    %c0_9 = arith.constant 0 : index
    %12 = vector.load %arg4[%c0_7, %c0_8, %c0_9] : memref<2x8x128xf32, #tpu.memory_space<vmem>>, vector<2x8x128xf32>
    tpu.vector_store %arg4[%c0_7, %c0_8, %c0_9], %11 {strides = array<i32>} : memref<2x8x128xf32, #tpu.memory_space<vmem>>, vector<2x8x128xf32>,
    return
  }
  func.func @transform_0(%arg0: i32) -> (i32, i32, i32) {
    %c0_i32 = arith.constant 0 : i32
    %c0_i32_0 = arith.constant 0 : i32
    %c0_i32_1 = arith.constant 0 : i32
    return %arg0, %c0_i32, %c0_i32_0 : i32, i32, i32
  }
  func.func @transform_1(%arg0: i32) -> (i32, i32) {
    %c0_i32 = arith.constant 0 : i32
    %c0_i32_0 = arith.constant 0 : i32
    %c0_i32_1 = arith.constant 0 : i32
    return %c0_i32, %c0_i32_0 : i32, i32
  }
  func.func @transform_2(%arg0: i32) -> (i32, i32) {
    %c0_i32 = arith.constant 0 : i32
    %c0_i32_0 = arith.constant 0 : i32
    %c0_i32_1 = arith.constant 0 : i32
    return %c0_i32, %c0_i32_0 : i32, i32
  }
  func.func @transform_3(%arg0: i32) -> (i32, i32, i32) {
    %c0_i32 = arith.constant 0 : i32
    %c0_i32_0 = arith.constant 0 : i32
    %c0_i32_1 = arith.constant 0 : i32
    return %arg0, %c0_i32, %c0_i32_0 : i32, i32, i32
  }
}

</mosaic_0001>

<llo_original>
// kernel: tpu_custom_call.1
$region0: #{tpu_custom_call.1}
  #allocation0 [shape = 'u32[]', space=smem, size = 0x4, offset = 0x4, fixed_abs, tag = 'smem constant byte address 0x4 - core index']
  #allocation1 [shape = 'u32[144,128]{1,0:T(1,128)}', space=vmem, size = 0x12000, scoped, tag = 'internal scratch']
  %s0 = inlined_call_operand.hbm [shape: f32[2,8,32], index: 0, kind: input, shape index: {}]
  %s1 = inlined_call_operand.hbm [shape: f32[32,128], index: 1, kind: input, shape index: {}]
  %s2 = inlined_call_operand.vmem [shape: f32[1,128], index: 2, kind: input, shape index: {}]
  %s3 = inlined_call_operand.hbm [shape: f32[2,8,128], index: 3, kind: output, shape index: {}]
  %s4 = sld [smem:[#allocation0]]
  $region30: #{tpu_custom_call.1} parent=0
    _
  %s6 = ssub.s32 1, %s4
  %s7 = scalar_select 0, %s6, %s4
  $region1: #{tpu_custom_call.1} parent=0
    #allocation2 [shape = 'u8[8192]{0}', space=vmem, size = 0x2000, scoped, tag = 'input window, operand 0, single buffered']
    #allocation3 [shape = 's32[1]{0}', space=sflag, size = 0x4, scoped, tag = 'scoped memory for tpu_custom_call.1']
    #allocation4 [shape = 's32[1]{0}', space=sflag, size = 0x4, scoped, tag = 'scoped memory for tpu_custom_call.1']
    #allocation5 [shape = 'u8[16384]{0}', space=vmem, size = 0x4000, scoped, tag = 'input window, operand 1, single buffered']
    #allocation6 [shape = 's32[1]{0}', space=sflag, size = 0x4, scoped, tag = 'scoped memory for tpu_custom_call.1']
    #allocation7 [shape = 'u8[8192]{0}', space=vmem, size = 0x2000, scoped, tag = 'output window, operand 0, single buffered']
    %8 = vsyncpa [#allocation3], 0
    %9 = vsyncpa [#allocation6], 0
    %10 = vsyncpa [#allocation4], 0
    // Predicated region
    $region2: #{tpu_custom_call.1} parent=1 // pred_check
      _
    $region3: #{tpu_custom_call.1} parent=1 // pred_check_branch
      %12 = sbr.rel (0) target = $region5
    $region4: #{tpu_custom_call.1} parent=1 // pred_region
      %s14 = ssub.s32 256, 256
      %15 = vsyncadd [#allocation3], %s14
      %s16 = sshll.u32 [#allocation2], 4
      %s17 = int_to_ptr.vmem [resolvable:$true] %s16
      %22 = dma.hbm_to_vmem [thread:$0]  %s0, 256, %s17, [#allocation3], 128, 128, 8
    $region5: #{tpu_custom_call.1} parent=1 // pred_fallthru
      _
    // Predicated region
    $region6: #{tpu_custom_call.1} parent=1 // pred_check
      _
    $region7: #{tpu_custom_call.1} parent=1 // pred_check_branch
      %24 = sbr.rel (0) target = $region9
    $region8: #{tpu_custom_call.1} parent=1 // pred_region
      %s26 = ssub.s32 512, 512
      %27 = vsyncadd [#allocation6], %s26
      %s28 = sshll.u32 [#allocation5], 4
      %s29 = int_to_ptr.vmem [resolvable:$true] %s28
      %34 = dma.hbm_to_vmem [thread:$0]  %s1, 512, %s29, [#allocation6], 128, 128, 8
    $region9: #{tpu_custom_call.1} parent=1 // pred_fallthru
      _
    // Predicated region
    $region10: #{tpu_custom_call.1} parent=1 // pred_check
      _
    $region11: #{tpu_custom_call.1} parent=1 // pred_check_branch
      %36 = sbr.rel (0) target = $region13
    $region12: #{tpu_custom_call.1} parent=1 // pred_region
      _
    $region13: #{tpu_custom_call.1} parent=1 // pred_fallthru
      _
    // Predicated region
    $region14: #{tpu_custom_call.1} parent=1 // pred_check
      _
    $region15: #{tpu_custom_call.1} parent=1 // pred_check_branch
      %38 = sbr.rel (0) target = $region17
    $region16: #{tpu_custom_call.1} parent=1 // pred_region
      %39 = dma.done [#allocation3], 256
    $region17: #{tpu_custom_call.1} parent=1 // pred_fallthru
      _
    // Predicated region
    $region18: #{tpu_custom_call.1} parent=1 // pred_check
      _
    $region19: #{tpu_custom_call.1} parent=1 // pred_check_branch
      %41 = sbr.rel (0) target = $region21
    $region20: #{tpu_custom_call.1} parent=1 // pred_region
      %42 = dma.done [#allocation6], 512
    $region21: #{tpu_custom_call.1} parent=1 // pred_fallthru
      _
    %v43 = vld [vmem:[#allocation2] sm:$0xff]
    %v44 = vld [vmem:[#allocation2 + $0x8] sm:$0xff]
    %vm45 = vcmask 261120
    %v46 = vsel %vm45, %v43, 0.0
    %v47 = vrot.slane %v46, 4
    %v48 = vadd.f32 %v46, %v47
    %v49 = vrot.slane %v48, 2
    %v50 = vadd.f32 %v48, %v49
    %v51 = vrot.slane %v50, 1
    %v52 = vadd.f32 %v50, %v51
    %v53 = vsel %vm45, %v44, 0.0
    %v54 = vrot.slane %v53, 4
    %v55 = vadd.f32 %v53, %v54
    %v56 = vrot.slane %v55, 2
    %v57 = vadd.f32 %v55, %v56
    %v58 = vrot.slane %v57, 1
    %v59 = vadd.f32 %v57, %v58
    %v60 = vsub.f32 %v43, %v52
    %v61 = vsub.f32 %v44, %v59
    %v62 = vld [vmem:[#allocation5] sm:$0xff]
    %v63 = vld [vmem:[#allocation5 + $0x8] sm:$0xff]
    %v64 = vld [vmem:[#allocation5 + $0x10] sm:$0xff]
    %v65 = vld [vmem:[#allocation5 + $0x18] sm:$0xff]
    %v66 = vld [vmem:[%s2] sm:$0x1]
    %v68 = vlaneseq
    %v69 = vshrl.u32 %v68, 7
    %v70 = vsub.s32 0, %v69
    %v71 = vrot.slane %v66, %v70
    %v74 = vsel %vm45, %v60, 0
    %v77 = vsel %vm45, %v61, 0
    %79 = vmatprep.subr.mxu0 0.0
    %80 = vmatpush1.msra.mxu0 %v62
    %81 = vmatprep.subr.mxu0 0.0
    %82 = vmatpush1.msra.mxu0 %v63
    %83 = vmatprep.subr.mxu0 0.0
    %84 = vmatpush1.msra.mxu0 %v64
    %85 = vmatprep.subr.mxu0 0.0
    %86 = vmatpush1.msra.mxu0 %v65
    %87 = vmatprep.subr.mxu0 0.0
    %88 = vmatpush1.msra.mxu0 0.0
    %89 = vmatprep.subr.mxu0 0.0
    %90 = vmatpush1.msra.mxu0 0.0
    %91 = vmatprep.subr.mxu0 0.0
    %92 = vmatpush1.msra.mxu0 0.0
    %93 = vmatprep.subr.mxu0 0.0
    %94 = vmatpush1.msra.mxu0 0.0
    %95 = vmatprep.subr.mxu0 0.0
    %96 = vmatpush1.msra.mxu0 0.0
    %97 = vmatprep.subr.mxu0 0.0
    %98 = vmatpush1.msra.mxu0 0.0
    %99 = vmatprep.subr.mxu0 0.0
    %100 = vmatpush1.msra.mxu0 0.0
    %101 = vmatprep.subr.mxu0 0.0
    %102 = vmatpush1.msra.mxu0 0.0
    %103 = vmatprep.subr.mxu0 0.0
    %104 = vmatpush1.msra.mxu0 0.0
    %105 = vmatprep.subr.mxu0 0.0
    %106 = vmatpush1.msra.mxu0 0.0
    %107 = vmatprep.subr.mxu0 0.0
    %108 = vmatpush1.msra.mxu0 0.0
    %109 = vmatprep.subr.mxu0 0.0
    %110 = vmatpush1.msra.mxu0 0.0
    %111 = vmatprep.subr.mxu0 0.0
    %112 = vmatpush1.msra.mxu0 0.0
    %113 = vmatprep.subr.mxu0 0.0
    %114 = vmatpush1.msra.mxu0 0.0
    %115 = vmatprep.subr.mxu0 0.0
    %116 = vmatpush1.msra.mxu0 0.0
    %117 = vmatprep.subr.mxu0 0.0
    %118 = vmatpush1.msra.mxu0 0.0
    %119 = vmatprep.subr.mxu0 0.0
    %120 = vmatpush1.msra.mxu0 0.0
    %121 = vmatprep.subr.mxu0 0.0
    %122 = vmatpush1.msra.mxu0 0.0
    %123 = vmatprep.subr.mxu0 0.0
    %124 = vmatpush1.msra.mxu0 0.0
    %125 = vmatprep.subr.mxu0 0.0
    %126 = vmatpush1.msra.mxu0 0.0
    %127 = vmatprep.subr.mxu0 0.0
    %128 = vmatpush1.msra.mxu0 0.0
    %129 = vmatprep.subr.mxu0 0.0
    %130 = vmatpush1.msra.mxu0 0.0
    %131 = vmatprep.subr.mxu0 0.0
    %132 = vmatpush1.msra.mxu0 0.0
    %133 = vmatprep.subr.mxu0 0.0
    %134 = vmatpush1.msra.mxu0 0.0
    %135 = vmatprep.subr.mxu0 0.0
    %136 = vmatpush1.msra.mxu0 0.0
    %137 = vmatprep.subr.mxu0 0.0
    %138 = vmatpush1.msra.mxu0 0.0
    %139 = vmatprep.subr.mxu0 0.0
    %140 = vmatpush1.msra.mxu0 0.0
    %141 = vmatprep.subr.mxu0 0.0
    %142 = vmatpush1.msra.mxu0 0.0
    %143 = vmatprep.mubr.f32.mxu0 0.0
    %144 = vmatmul.mubr.f32.gmra.mrb[0].mxu0 %v74
    %v145 = vpop.f32.mrb[0].mxu0
    %v146 = vadd.f32 %v71, %v145
    %v147 = vpop.f32.mrb[0].mxu0
    %148 = vmatprep.mubr.f32.mxu0 0.0
    %149 = vmatmul.mubr.f32.gmra.mrb[0].mxu0 %v77
    %v150 = vpop.f32.mrb[0].mxu0
    %v151 = vadd.f32 %v71, %v150
    %v152 = vpop.f32.mrb[0].mxu0
    %153 = vdwg.mxu0
    %154 = vst [vmem:[#allocation7] sm:$0xff] %v146
    %155 = vst [vmem:[#allocation7 + $0x8] sm:$0xff] %v151
    // Predicated region
    $region22: #{tpu_custom_call.1} parent=1 // pred_check
      _
    $region23: #{tpu_custom_call.1} parent=1 // pred_check_branch
      %157 = sbr.rel (0) target = $region25
    $region24: #{tpu_custom_call.1} parent=1 // pred_region
      %s159 = ssub.s32 256, 256
      %160 = vsyncadd [#allocation4], %s159
      %s161 = sshll.u32 [#allocation7], 4
      %s162 = int_to_ptr.vmem [resolvable:$true] %s161
      %167 = dma.vmem_to_hbm [thread:$0]  %s162, 256, %s3, [#allocation4], 128, 128, 8
    $region25: #{tpu_custom_call.1} parent=1 // pred_fallthru
      _
    // Predicated region
    $region26: #{tpu_custom_call.1} parent=1 // pred_check
      _
    $region27: #{tpu_custom_call.1} parent=1 // pred_check_branch
      %169 = sbr.rel (0) target = $region29
    $region28: #{tpu_custom_call.1} parent=1 // pred_region
      %170 = dma.done [#allocation4], 256
    $region29: #{tpu_custom_call.1} parent=1 // pred_fallthru
      _
    %171 = vsyncpa [#allocation3], 1
    %172 = vsyncpa [#allocation6], 1
    %173 = vsyncpa [#allocation4], 1

// kernel: tpu_custom_call.1
$region0: #{tpu_custom_call.1}
  #allocation0 [shape = 'u32[]', space=smem, size = 0x4, offset = 0x4, fixed_abs, tag = 'smem constant byte address 0x4 - core index']
  #allocation1 [shape = 'u32[144,128]{1,0:T(1,128)}', space=vmem, size = 0x12000, scoped, tag = 'internal scratch']
  %s0 = inlined_call_operand.hbm [shape: f32[2,8,32], index: 0, kind: input, shape index: {}]
  %s1 = inlined_call_operand.hbm [shape: f32[32,128], index: 1, kind: input, shape index: {}]
  %s2 = inlined_call_operand.vmem [shape: f32[1,128], index: 2, kind: input, shape index: {}]
  %s3 = inlined_call_operand.hbm [shape: f32[2,8,128], index: 3, kind: output, shape index: {}]
  %s4 = sld [smem:[#allocation0]]
  $region30: #{tpu_custom_call.1} parent=0
    _
  %s6 = ssub.s32 1, %s4
  %s7 = scalar_select 0, %s6, %s4
  $region1: #{tpu_custom_call.1} parent=0
    #allocation2 [shape = 'u8[8192]{0}', space=vmem, size = 0x2000, scoped, tag = 'input window, operand 0, single buffered']
    #allocation3 [shape = 's32[1]{0}', space=sflag, size = 0x4, scoped, tag = 'scoped memory for tpu_custom_call.1']
    #allocation4 [shape = 's32[1]{0}', space=sflag, size = 0x4, scoped, tag = 'scoped memory for tpu_custom_call.1']
    #allocation5 [shape = 'u8[16384]{0}', space=vmem, size = 0x4000, scoped, tag = 'input window, operand 1, single buffered']
    #allocation6 [shape = 's32[1]{0}', space=sflag, size = 0x4, scoped, tag = 'scoped memory for tpu_custom_call.1']
    #allocation7 [shape = 'u8[8192]{0}', space=vmem, size = 0x2000, scoped, tag = 'output window, operand 0, single buffered']
    %8 = vsyncpa [#allocation3], 0
    %9 = vsyncpa [#allocation6], 0
    %10 = vsyncpa [#allocation4], 0
    // Predicated region
    $region2: #{tpu_custom_call.1} parent=1 // pred_check
      _
    $region3: #{tpu_custom_call.1} parent=1 // pred_check_branch
      %12 = sbr.rel (0) target = $region5
    $region4: #{tpu_custom_call.1} parent=1 // pred_region
      %s14 = ssub.s32 256, 256
      %15 = vsyncadd [#allocation3], %s14
      %s16 = sshll.u32 [#allocation2], 4
      %s17 = int_to_ptr.vmem [resolvable:$true] %s16
      %22 = dma.hbm_to_vmem [thread:$0]  %s0, 256, %s17, [#allocation3], 128, 128, 8
    $region5: #{tpu_custom_call.1} parent=1 // pred_fallthru
      _
    // Predicated region
    $region6: #{tpu_custom_call.1} parent=1 // pred_check
      _
    $region7: #{tpu_custom_call.1} parent=1 // pred_check_branch
      %24 = sbr.rel (0) target = $region9
    $region8: #{tpu_custom_call.1} parent=1 // pred_region
      %s26 = ssub.s32 512, 512
      %27 = vsyncadd [#allocation6], %s26
      %s28 = sshll.u32 [#allocation5], 4
      %s29 = int_to_ptr.vmem [resolvable:$true] %s28
      %34 = dma.hbm_to_vmem [thread:$0]  %s1, 512, %s29, [#allocation6], 128, 128, 8
    $region9: #{tpu_custom_call.1} parent=1 // pred_fallthru
      _
    // Predicated region
    $region10: #{tpu_custom_call.1} parent=1 // pred_check
      _
    $region11: #{tpu_custom_call.1} parent=1 // pred_check_branch
      %36 = sbr.rel (0) target = $region13
    $region12: #{tpu_custom_call.1} parent=1 // pred_region
      _
    $region13: #{tpu_custom_call.1} parent=1 // pred_fallthru
      _
    // Predicated region
    $region14: #{tpu_custom_call.1} parent=1 // pred_check
      _
    $region15: #{tpu_custom_call.1} parent=1 // pred_check_branch
      %38 = sbr.rel (0) target = $region17
    $region16: #{tpu_custom_call.1} parent=1 // pred_region
      %39 = dma.done [#allocation3], 256
    $region17: #{tpu_custom_call.1} parent=1 // pred_fallthru
      _
    // Predicated region
    $region18: #{tpu_custom_call.1} parent=1 // pred_check
      _
    $region19: #{tpu_custom_call.1} parent=1 // pred_check_branch
      %41 = sbr.rel (0) target = $region21
    $region20: #{tpu_custom_call.1} parent=1 // pred_region
      %42 = dma.done [#allocation6], 512
    $region21: #{tpu_custom_call.1} parent=1 // pred_fallthru
      _
    %v43 = vld [vmem:[#allocation2] sm:$0xff]
    %v44 = vld [vmem:[#allocation2 + $0x8] sm:$0xff]
    %vm45 = vcmask 261120
    %v46 = vsel %vm45, %v43, 0.0
    %v47 = vrot.slane %v46, 4
    %v48 = vadd.f32 %v46, %v47
    %v49 = vrot.slane %v48, 2
    %v50 = vadd.f32 %v48, %v49
    %v51 = vrot.slane %v50, 1
    %v52 = vadd.f32 %v50, %v51
    %v53 = vsel %vm45, %v44, 0.0
    %v54 = vrot.slane %v53, 4
    %v55 = vadd.f32 %v53, %v54
    %v56 = vrot.slane %v55, 2
    %v57 = vadd.f32 %v55, %v56
    %v58 = vrot.slane %v57, 1
    %v59 = vadd.f32 %v57, %v58
    %v60 = vsub.f32 %v43, %v52
    %v61 = vsub.f32 %v44, %v59
    %v62 = vld [vmem:[#allocation5] sm:$0xff]
    %v63 = vld [vmem:[#allocation5 + $0x8] sm:$0xff]
    %v64 = vld [vmem:[#allocation5 + $0x10] sm:$0xff]
    %v65 = vld [vmem:[#allocation5 + $0x18] sm:$0xff]
    %v66 = vld [vmem:[%s2] sm:$0x1]
    %v68 = vlaneseq
    %v69 = vshrl.u32 %v68, 7
    %v70 = vsub.s32 0, %v69
    %v71 = vrot.slane %v66, %v70
    %v74 = vsel %vm45, %v60, 0
    %v77 = vsel %vm45, %v61, 0
    %79 = vmatprep.subr.mxu0 0.0
    %80 = vmatpush1.msra.mxu0 %v62
    %81 = vmatprep.subr.mxu0 0.0
    %82 = vmatpush1.msra.mxu0 %v63
    %83 = vmatprep.subr.mxu0 0.0
    %84 = vmatpush1.msra.mxu0 %v64
    %85 = vmatprep.subr.mxu0 0.0
    %86 = vmatpush1.msra.mxu0 %v65
    %87 = vmatprep.subr.mxu0 0.0
    %88 = vmatpush1.msra.mxu0 0.0
    %89 = vmatprep.subr.mxu0 0.0
    %90 = vmatpush1.msra.mxu0 0.0
    %91 = vmatprep.subr.mxu0 0.0
    %92 = vmatpush1.msra.mxu0 0.0
    %93 = vmatprep.subr.mxu0 0.0
    %94 = vmatpush1.msra.mxu0 0.0
    %95 = vmatprep.subr.mxu0 0.0
    %96 = vmatpush1.msra.mxu0 0.0
    %97 = vmatprep.subr.mxu0 0.0
    %98 = vmatpush1.msra.mxu0 0.0
    %99 = vmatprep.subr.mxu0 0.0
    %100 = vmatpush1.msra.mxu0 0.0
    %101 = vmatprep.subr.mxu0 0.0
    %102 = vmatpush1.msra.mxu0 0.0
    %103 = vmatprep.subr.mxu0 0.0
    %104 = vmatpush1.msra.mxu0 0.0
    %105 = vmatprep.subr.mxu0 0.0
    %106 = vmatpush1.msra.mxu0 0.0
    %107 = vmatprep.subr.mxu0 0.0
    %108 = vmatpush1.msra.mxu0 0.0
    %109 = vmatprep.subr.mxu0 0.0
    %110 = vmatpush1.msra.mxu0 0.0
    %111 = vmatprep.subr.mxu0 0.0
    %112 = vmatpush1.msra.mxu0 0.0
    %113 = vmatprep.subr.mxu0 0.0
    %114 = vmatpush1.msra.mxu0 0.0
    %115 = vmatprep.subr.mxu0 0.0
    %116 = vmatpush1.msra.mxu0 0.0
    %117 = vmatprep.subr.mxu0 0.0
    %118 = vmatpush1.msra.mxu0 0.0
    %119 = vmatprep.subr.mxu0 0.0
    %120 = vmatpush1.msra.mxu0 0.0
    %121 = vmatprep.subr.mxu0 0.0
    %122 = vmatpush1.msra.mxu0 0.0
    %123 = vmatprep.subr.mxu0 0.0
    %124 = vmatpush1.msra.mxu0 0.0
    %125 = vmatprep.subr.mxu0 0.0
    %126 = vmatpush1.msra.mxu0 0.0
    %127 = vmatprep.subr.mxu0 0.0
    %128 = vmatpush1.msra.mxu0 0.0
    %129 = vmatprep.subr.mxu0 0.0
    %130 = vmatpush1.msra.mxu0 0.0
    %131 = vmatprep.subr.mxu0 0.0
    %132 = vmatpush1.msra.mxu0 0.0
    %133 = vmatprep.subr.mxu0 0.0
    %134 = vmatpush1.msra.mxu0 0.0
    %135 = vmatprep.subr.mxu0 0.0
    %136 = vmatpush1.msra.mxu0 0.0
    %137 = vmatprep.subr.mxu0 0.0
    %138 = vmatpush1.msra.mxu0 0.0
    %139 = vmatprep.subr.mxu0 0.0
    %140 = vmatpush1.msra.mxu0 0.0
    %141 = vmatprep.subr.mxu0 0.0
    %142 = vmatpush1.msra.mxu0 0.0
    %143 = vmatprep.mubr.f32.mxu0 0.0
    %144 = vmatmul.mubr.f32.gmra.mrb[0].mxu0 %v74
    %v145 = vpop.f32.mrb[0].mxu0
    %v146 = vadd.f32 %v71, %v145
    %v147 = vpop.f32.mrb[0].mxu0
    %148 = vmatprep.mubr.f32.mxu0 0.0
    %149 = vmatmul.mubr.f32.gmra.mrb[0].mxu0 %v77
    %v150 = vpop.f32.mrb[0].mxu0
    %v151 = vadd.f32 %v71, %v150
    %v152 = vpop.f32.mrb[0].mxu0
    %153 = vdwg.mxu0
    %154 = vst [vmem:[#allocation7] sm:$0xff] %v146
    %155 = vst [vmem:[#allocation7 + $0x8] sm:$0xff] %v151
    // Predicated region
    $region22: #{tpu_custom_call.1} parent=1 // pred_check
      _
    $region23: #{tpu_custom_call.1} parent=1 // pred_check_branch
      %157 = sbr.rel (0) target = $region25
    $region24: #{tpu_custom_call.1} parent=1 // pred_region
      %s159 = ssub.s32 256, 256
      %160 = vsyncadd [#allocation4], %s159
      %s161 = sshll.u32 [#allocation7], 4
      %s162 = int_to_ptr.vmem [resolvable:$true] %s161
      %167 = dma.vmem_to_hbm [thread:$0]  %s162, 256, %s3, [#allocation4], 128, 128, 8
    $region25: #{tpu_custom_call.1} parent=1 // pred_fallthru
      _
    // Predicated region
    $region26: #{tpu_custom_call.1} parent=1 // pred_check
      _
    $region27: #{tpu_custom_call.1} parent=1 // pred_check_branch
      %169 = sbr.rel (0) target = $region29
    $region28: #{tpu_custom_call.1} parent=1 // pred_region
      %170 = dma.done [#allocation4], 256
    $region29: #{tpu_custom_call.1} parent=1 // pred_fallthru
      _
    %171 = vsyncpa [#allocation3], 1
    %172 = vsyncpa [#allocation6], 1
    %173 = vsyncpa [#allocation4], 1

</llo_original>
